<compile_context>
chip_gen: v7x
topology: tpu7x:2x2x1
jax: 0.10.0
libtpu: 0.0.40
codegen_flags: <defaults>
</compile_context>

<pallas_src>
import jax
import jax.numpy as jnp
from jax.experimental import pallas as pl
from jax.experimental.pallas import tpu as pltpu

_LANES = 128
_SUBLANES = 8
# 4096 rows * 128 lanes * 4 B = 2 MiB per f32 block.
_MAX_BLOCK_ROWS = 4096
_VMEM_LIMIT_BYTES = 32 * 1024 * 1024


def linear11_kernel(w_ref, b_ref, x_ref, o_ref):
    # w_ref, b_ref: (1, 1) scalars in SMEM.
    # x_ref, o_ref: (block_rows, 128) lane-dense tiles in VMEM.
    w = w_ref[0, 0]
    b = b_ref[0, 0]
    # Pure VPU: one fused scale + bias per vreg; no MXU involvement.
    o_ref[...] = x_ref[...] * w + b


def _round_up(v, m):
    return ((v + m - 1) // m) * m


def linear_forward(x, weight, bias):
    """y = x @ weight.T + bias for nn.Linear(1, 1) semantics.

    x: (N, 1) float32, weight: (1, 1), bias: (1,).  Returns (N, 1).
    """
    n, k = x.shape
    out_f, k_w = weight.shape
    assert k == 1 and k_w == 1 and out_f == 1, "specialized for nn.Linear(1, 1)"

    if n == 0:
        return jnp.zeros((0, 1), dtype=x.dtype)

    # ---- lane-dense packing of the batch -------------------------------
    rows = pl.cdiv(n, _LANES)
    n_pad = rows * _LANES

    x_flat = x.reshape(-1)
    if n_pad != n:
        # Tail pad only up to the next lane multiple (at most 127 elements).
        x_flat = jnp.pad(x_flat, (0, n_pad - n))
    # Free (metadata-only) reshape when no pad was needed.
    x_slab = x_flat.reshape(rows, _LANES)

    # ---- block size: large streaming blocks, >=2 grid steps when possible
    if rows <= _SUBLANES:
        # Single block equal to the full array extent (no (8,128) constraint
        # when the block covers the whole dim).
        block_rows = rows
    else:
        target = min(_MAX_BLOCK_ROWS, pl.cdiv(rows, 2))  # >= 2 blocks
        block_rows = _round_up(target, _SUBLANES)
    num_blocks = pl.cdiv(rows, block_rows)  # partial last block is masked

    w2d = weight.reshape(1, 1).astype(jnp.float32)
    b2d = bias.reshape(1, 1).astype(jnp.float32)

    bytes_accessed = 2 * n_pad * 4 + 8  # x in + y out + scalars

    out_slab = pl.pallas_call(
        linear11_kernel,
        out_shape=jax.ShapeDtypeStruct((rows, _LANES), x.dtype),
        grid=(num_blocks,),
        in_specs=[
            pl.BlockSpec(memory_space=pltpu.MemorySpace.SMEM),  # weight scalar
            pl.BlockSpec(memory_space=pltpu.MemorySpace.SMEM),  # bias scalar
            pl.BlockSpec((block_rows, _LANES), lambda i: (i, 0)),
        ],
        out_specs=pl.BlockSpec((block_rows, _LANES), lambda i: (i, 0)),
        compiler_params=pltpu.CompilerParams(
            dimension_semantics=("parallel",),
            vmem_limit_bytes=_VMEM_LIMIT_BYTES,
        ),
        cost_estimate=pl.CostEstimate(
            flops=2 * n, transcendentals=0, bytes_accessed=bytes_accessed
        ),
    )(w2d, b2d, x_slab)

    # Unpack the lane-dense slab back to PyTorch's (N, 1) layout.
    out_flat = out_slab.reshape(-1)
    if n_pad != n:
        out_flat = out_flat[:n]
    return out_flat.reshape(n, 1)


if __name__ == "__main__":
    key = jax.random.PRNGKey(0)
    k_x, k_w, k_b = jax.random.split(key, 3)

    batch = 8
    in_features = 1
    out_features = 1

    # nn.Linear init: U(-1/sqrt(fan_in), 1/sqrt(fan_in)); fan_in = 1 -> U(-1, 1).
    weight = jax.random.uniform(
        k_w, (out_features, in_features), dtype=jnp.float32, minval=-1.0, maxval=1.0
    )
    bias = jax.random.uniform(
        k_b, (out_features,), dtype=jnp.float32, minval=-1.0, maxval=1.0
    )
    x = jax.random.normal(k_x, (batch, in_features), dtype=jnp.float32)

    y = linear_forward(x, weight, bias)
    jax.block_until_ready(y)

    # Reference check against plain JAX.
    y_ref = x @ weight.T + bias
    assert y.shape == (batch, out_features)
    assert jnp.allclose(y, y_ref, atol=1e-6), "mismatch vs reference"

    print("KERNEL_OK")
</pallas_src>

<mosaic_0001>
module attributes {stable_mosaic.version = 11 : i64} {
  func.func @linear11_kernel(%arg0: i32, %arg1: memref<1x1xf32, #tpu.memory_space<smem>>, %arg2: memref<1x1xf32, #tpu.memory_space<smem>>, %arg3: memref<1x128xf32, #tpu.memory_space<vmem>>, %arg4: memref<1x128xf32, #tpu.memory_space<vmem>>) attributes {dimension_semantics = [#tpu.dimension_semantics<parallel>], iteration_bounds = array<i64: 1>, scalar_prefetch = 0 : i64, scratch_operands = 0 : i64, tpu.core_type = #tpu.core_type<tc>, window_params = [{transform_indices = @transform_0, window_bounds = array<i64: 1, 1>}, {transform_indices = @transform_1, window_bounds = array<i64: 1, 1>}, {transform_indices = @transform_2, window_bounds = array<i64: 1, 128>}, {transform_indices = @transform_3, window_bounds = array<i64: 1, 128>}]} {
    %c0 = arith.constant 0 : index
    %c0_0 = arith.constant 0 : index
    %0 = memref.load %arg1[%c0, %c0_0] : memref<1x1xf32, #tpu.memory_space<smem>>
    %c0_1 = arith.constant 0 : index
    %c0_2 = arith.constant 0 : index
    %1 = memref.load %arg2[%c0_1, %c0_2] : memref<1x1xf32, #tpu.memory_space<smem>>
    %c0_3 = arith.constant 0 : index
    %c0_4 = arith.constant 0 : index
    %2 = vector.load %arg3[%c0_3, %c0_4] : memref<1x128xf32, #tpu.memory_space<vmem>>, vector<1x128xf32>
    %3 = vector.broadcast %0 : f32 to vector<1x128xf32>
    %4 = arith.mulf %2, %3 : vector<1x128xf32>
    %5 = vector.broadcast %1 : f32 to vector<1x128xf32>
    %6 = arith.addf %4, %5 : vector<1x128xf32>
    %c0_5 = arith.constant 0 : index
    %c0_6 = arith.constant 0 : index
    %7 = vector.load %arg4[%c0_5, %c0_6] : memref<1x128xf32, #tpu.memory_space<vmem>>, vector<1x128xf32>
    tpu.vector_store %arg4[%c0_5, %c0_6], %6 {strides = array<i32>} : memref<1x128xf32, #tpu.memory_space<vmem>>, vector<1x128xf32>,
    return
  }
  func.func @transform_0(%arg0: i32) -> (i32, i32) {
    %c0_i32 = arith.constant 0 : i32
    %c0_i32_0 = arith.constant 0 : i32
    %c0_i32_1 = arith.constant 0 : i32
    return %c0_i32, %c0_i32_0 : i32, i32
  }
  func.func @transform_1(%arg0: i32) -> (i32, i32) {
    %c0_i32 = arith.constant 0 : i32
    %c0_i32_0 = arith.constant 0 : i32
    %c0_i32_1 = arith.constant 0 : i32
    return %c0_i32, %c0_i32_0 : i32, i32
  }
  func.func @transform_2(%arg0: i32) -> (i32, i32) {
    %c0_i32 = arith.constant 0 : i32
    %c0_i32_0 = arith.constant 0 : i32
    return %arg0, %c0_i32 : i32, i32
  }
  func.func @transform_3(%arg0: i32) -> (i32, i32) {
    %c0_i32 = arith.constant 0 : i32
    %c0_i32_0 = arith.constant 0 : i32
    return %arg0, %c0_i32 : i32, i32
  }
}

</mosaic_0001>

<llo_original>
// kernel: tpu_custom_call.1
$region0: #{tpu_custom_call.1}
  #allocation0 [shape = 'u32[]', space=smem, size = 0x4, offset = 0x4, fixed_abs, tag = 'smem constant byte address 0x4 - core index']
  #allocation1 [shape = 'u32[144,128]{1,0:T(1,128)}', space=vmem, size = 0x12000, scoped, tag = 'internal scratch']
  #allocation2 [shape = 'f32[1,1]{1,0:T(1,128)S(6)}', space=smem, size = 0x200, scoped, tag = 'scoped memory for tpu_custom_call.1']
  #allocation3 [shape = 'f32[1,1]{1,0:T(1,128)S(6)}', space=smem, size = 0x200, scoped, tag = 'scoped memory for tpu_custom_call.1']
  %s0 = inlined_call_operand.<no memory space> [shape: f32[1,1], index: 0, kind: input, shape index: {}]
  %s1 = inlined_call_operand.<no memory space> [shape: f32[1,1], index: 1, kind: input, shape index: {}]
  %s2 = inlined_call_operand.vmem [shape: f32[1,128], index: 2, kind: input, shape index: {}]
  %s3 = inlined_call_operand.hbm [shape: f32[1,128], index: 3, kind: output, shape index: {}]
  %s4 = sld [smem:[#allocation0]]
  $region22: #{tpu_custom_call.1} parent=0
    _
  %s6 = ssub.s32 1, %s4
  %s7 = scalar_select 0, %s6, %s4
  %8 = sst [smem:[#allocation2]] %s0
  %9 = sst [smem:[#allocation3]] %s1
  $region1: #{tpu_custom_call.1} parent=0
    #allocation4 [shape = 'u8[512]{0}', space=vmem, size = 0x400, scoped, tag = 'output window, operand 0, single buffered']
    #allocation5 [shape = 's32[1]{0}', space=sflag, size = 0x4, scoped, tag = 'scoped memory for tpu_custom_call.1']
    %10 = vsyncpa [#allocation5], 0
    // Predicated region
    $region2: #{tpu_custom_call.1} parent=1 // pred_check
      _
    $region3: #{tpu_custom_call.1} parent=1 // pred_check_branch
      %12 = sbr.rel (0) target = $region5
    $region4: #{tpu_custom_call.1} parent=1 // pred_region
      _
    $region5: #{tpu_custom_call.1} parent=1 // pred_fallthru
      _
    // Predicated region
    $region6: #{tpu_custom_call.1} parent=1 // pred_check
      _
    $region7: #{tpu_custom_call.1} parent=1 // pred_check_branch
      %14 = sbr.rel (0) target = $region9
    $region8: #{tpu_custom_call.1} parent=1 // pred_region
      _
    $region9: #{tpu_custom_call.1} parent=1 // pred_fallthru
      _
    // Predicated region
    $region10: #{tpu_custom_call.1} parent=1 // pred_check
      _
    $region11: #{tpu_custom_call.1} parent=1 // pred_check_branch
      %16 = sbr.rel (0) target = $region13
    $region12: #{tpu_custom_call.1} parent=1 // pred_region
      _
    $region13: #{tpu_custom_call.1} parent=1 // pred_fallthru
      _
    %s17 = sld [smem:[#allocation2]]
    %s18 = sld [smem:[#allocation3]]
    %v19 = vld [vmem:[%s2] sm:$0x1]
    %v20 = vstv %s17
    %v21 = vmul.f32 %v19, %v20
    %v22 = vstv %s18
    %v23 = vadd.f32 %v21, %v22
    %24 = vst [vmem:[#allocation4] sm:$0x1] %v23
    // Predicated region
    $region14: #{tpu_custom_call.1} parent=1 // pred_check
      _
    $region15: #{tpu_custom_call.1} parent=1 // pred_check_branch
      %26 = sbr.rel (0) target = $region17
    $region16: #{tpu_custom_call.1} parent=1 // pred_region
      %s28 = ssub.s32 16, 16
      %29 = vsyncadd [#allocation5], %s28
      %s31 = sshll.u32 [#allocation4], 4
      %s32 = int_to_ptr.vmem [resolvable:$true] %s31
      %34 = dma.vmem_to_hbm [thread:$0]  %s32, 16, %s3, [#allocation5]
    $region17: #{tpu_custom_call.1} parent=1 // pred_fallthru
      _
    // Predicated region
    $region18: #{tpu_custom_call.1} parent=1 // pred_check
      _
    $region19: #{tpu_custom_call.1} parent=1 // pred_check_branch
      %36 = sbr.rel (0) target = $region21
    $region20: #{tpu_custom_call.1} parent=1 // pred_region
      %37 = dma.done [#allocation5], 16
    $region21: #{tpu_custom_call.1} parent=1 // pred_fallthru
      _
    %38 = vsyncpa [#allocation5], 1

</llo_original>
